<compile_context>
chip_gen: v5e
topology: v5e:2x2
jax: 0.10.0
libtpu: 0.0.40
codegen_flags: <defaults>
</compile_context>

<pallas_src>
from functools import partial

import jax
import jax.numpy as jnp
from jax.experimental import pallas as pl
from jax.experimental.pallas import tpu as pltpu


# --------------------------------------------------------------------------- #
# Kernel
# --------------------------------------------------------------------------- #
def _se_kernel(x_ref, w1t_ref, w2t_ref, o_ref, *, channels_last):
    # x_ref/o_ref: [bg, C, HW] (NCHW) or [bg, HW, C] (NHWC)
    # w1t_ref:     [C, HID] f32, already scaled by 1/(H*W)
    # w2t_ref:     [HID, C] f32
    red_axis = -2 if channels_last else -1

    # Global average pool (the 1/(H*W) is folded into w1t).  f32 accumulation
    # is requested through the reduction dtype instead of an explicit astype,
    # so no full-size f32 copy of the tile has to stay live.
    pooled = jnp.sum(x_ref[...], axis=red_axis, dtype=jnp.float32)      # [bg, C]

    # fc1 (bias-free) + exact GELU (erf form == torch nn.GELU default).
    h = jnp.dot(pooled, w1t_ref[...], preferred_element_type=jnp.float32)
    h = 0.5 * h * (1.0 + jax.lax.erf(h * jnp.float32(0.7071067811865476)))

    # fc2 (bias-free) + sigmoid.
    s = jax.nn.sigmoid(
        jnp.dot(h, w2t_ref[...], preferred_element_type=jnp.float32))   # [bg, C]
    s = s.astype(o_ref.dtype)

    # Channel-wise rescale in the input dtype.  Re-read the (VMEM-resident)
    # input ref so the multi-MiB tile value is not live across the MXU/EUP
    # section above (keeps vreg pressure low).
    if channels_last:
        o_ref[...] = x_ref[...] * s[:, None, :]
    else:
        o_ref[...] = x_ref[...] * s[:, :, None]


# --------------------------------------------------------------------------- #
# Tiling helpers
# --------------------------------------------------------------------------- #
def _vmem_budget(max_block_bytes=None):
    """Return (max_block_bytes, vmem_limit_bytes, vmem_capacity) per chip gen."""
    try:
        cap = int(pltpu.get_tpu_info().vmem_capacity_bytes)
    except Exception:  # interpret mode / unknown backend
        cap = None
    if cap is not None and cap >= (100 << 20):      # v5e / v6e: 128 MiB VMEM
        blk, limit = 16 << 20, 100 << 20
    else:                                           # v7x (64 MiB) or unknown
        blk, limit = 6 << 20, 48 << 20
    if max_block_bytes is not None:
        blk = int(max_block_bytes)
    return blk, limit, cap


def _pick_batch_group(b, per_sample_bytes, max_block_bytes, min_steps=4):
    """Largest divisor of b whose tile fits the byte budget, with a minimum
    number of grid steps enforced (so the pipeline / megacore are engaged).
    Prefers an even grid length if that does not shrink the tile below ~2 MiB
    (the per-step-overhead cliff)."""
    per_sample_bytes = max(int(per_sample_bytes), 1)
    cap = max(1, int(max_block_bytes) // per_sample_bytes)
    steps = max(1, min(min_steps, b))
    cap = min(cap, max(1, b // steps), b)

    divs = [d for d in range(1, cap + 1) if b % d == 0]
    bg = divs[-1]
    if (b // bg) % 2:  # odd grid: see if an even one is affordable
        floor = max(1, (2 << 20) // per_sample_bytes)
        for d in reversed(divs):
            if (b // d) % 2 == 0 and d >= min(floor, bg):
                bg = d
                break
    return bg


# --------------------------------------------------------------------------- #
# Wrapper
# --------------------------------------------------------------------------- #
def se_forward(x, w1, w2, *, data_format="NCHW", max_block_bytes=None,
               min_grid_steps=4):
    """SE forward.

    x : [B, C, H, W] if data_format == "NCHW", else [B, H, W, C].
    w1: [HID, C]  (torch nn.Linear weight layout of fc1)
    w2: [C, HID]  (torch nn.Linear weight layout of fc2)
    """
    if data_format == "NCHW":
        b, c, h, w = x.shape
        channels_last = False
    elif data_format == "NHWC":
        b, h, w, c = x.shape
        channels_last = True
    else:
        raise ValueError(f"unknown data_format {data_format!r}")

    hw = h * w
    hid = w1.shape[0]
    # Merging the two trailing spatial dims is a free (contiguous) reshape.
    x3 = x.reshape(b, hw, c) if channels_last else x.reshape(b, c, hw)

    # ---- batch-group tiling -------------------------------------------------
    blk_budget, vmem_limit, vmem_cap = _vmem_budget(max_block_bytes)
    itemsize = jnp.dtype(x.dtype).itemsize
    per_sample = c * hw * itemsize
    bg = _pick_batch_group(b, per_sample, blk_budget, min_grid_steps)
    grid = (b // bg,)
    tile_bytes = bg * per_sample

    # Guard: a single sample bigger than the tile budget cannot be split here
    # (that would need an HW-reduction grid axis), so raise the scoped VMEM
    # limit to cover 2x(in)+2x(out) buffers plus a possible f32 reduce temp.
    # TODO(synk): add an HW-split reduction grid for samples that exceed VMEM.
    needed = 4 * tile_bytes + 2 * tile_bytes + (4 << 20)
    if needed > vmem_limit:
        phys = vmem_cap if vmem_cap is not None else (64 << 20)
        vmem_limit = max(vmem_limit, min(needed, phys - (4 << 20)))

    # ---- weights: transpose once, fold the pooling 1/(H*W) into W1 ----------
    w1t = w1.astype(jnp.float32).T * jnp.float32(1.0 / hw)     # [C, HID]
    w2t = w2.astype(jnp.float32).T                             # [HID, C]

    blk = (bg, hw, c) if channels_last else (bg, c, hw)
    xo_spec = pl.BlockSpec(blk, lambda i: (i, 0, 0))

    cost = pl.CostEstimate(
        flops=int(2 * b * c * hw + 4 * b * c * hid),
        transcendentals=int(b * (hid + c)),
        bytes_accessed=int(2 * b * c * hw * itemsize + 2 * c * hid * 4),
    )

    out = pl.pallas_call(
        partial(_se_kernel, channels_last=channels_last),
        out_shape=jax.ShapeDtypeStruct(x3.shape, x.dtype),
        grid=grid,
        in_specs=[
            xo_spec,
            pl.BlockSpec((c, hid), lambda i: (0, 0)),
            pl.BlockSpec((hid, c), lambda i: (0, 0)),
        ],
        out_specs=xo_spec,
        compiler_params=pltpu.CompilerParams(
            dimension_semantics=("parallel",),   # megacore on v7x, no-op elsewhere
            vmem_limit_bytes=int(vmem_limit),
        ),
        cost_estimate=cost,
    )(x3, w1t, w2t)

    return out.reshape(x.shape)


# --------------------------------------------------------------------------- #
# Pure-JAX reference + self-test
# --------------------------------------------------------------------------- #
def se_reference(x_nchw, w1, w2):
    y = jnp.mean(x_nchw.astype(jnp.float32), axis=(2, 3))      # [B, C]
    y = y @ w1.astype(jnp.float32).T
    y = 0.5 * y * (1.0 + jax.lax.erf(y / jnp.sqrt(2.0)))
    y = jax.nn.sigmoid(y @ w2.astype(jnp.float32).T)
    return (x_nchw.astype(jnp.float32) * y[:, :, None, None]).astype(x_nchw.dtype)


if __name__ == "__main__":
    key = jax.random.PRNGKey(0)

    def run_case(b, c, h, w, data_format):
        hid = max(1, int(c * 0.25))
        kx, k1, k2 = jax.random.split(jax.random.fold_in(key, 1000 * b + c), 3)
        x = jax.random.normal(kx, (b, c, h, w), dtype=jnp.float32)
        w1 = jax.random.normal(k1, (hid, c), dtype=jnp.float32) * 0.2
        w2 = jax.random.normal(k2, (c, hid), dtype=jnp.float32) * 0.2
        ref = jax.block_until_ready(se_reference(x, w1, w2))
        if data_format == "NHWC":
            out = se_forward(jnp.transpose(x, (0, 2, 3, 1)), w1, w2,
                             data_format="NHWC")
            out = jnp.transpose(out, (0, 3, 1, 2))
        else:
            out = se_forward(x, w1, w2)
        out = jax.block_until_ready(out)
        assert out.shape == x.shape
        assert jnp.allclose(out, ref, atol=1e-4, rtol=1e-4), \
            f"mismatch for case {(b, c, h, w, data_format)}"

    # Small shapes consistent with the module (hidden = int(C * 0.25)).
    run_case(4, 8, 16, 16, "NCHW")   # grid=(4,), bg=1: even, pipelined grid
    run_case(8, 8, 16, 16, "NCHW")   # grid=(4,), bg=2: multi-sample tiles
    run_case(5, 8, 16, 16, "NCHW")   # odd batch: divisor fallback path
    run_case(4, 8, 16, 16, "NHWC")   # channels-last layout (lane-dense at real C)

    print("KERNEL_OK")
</pallas_src>

<mosaic_0001>
module attributes {stable_mosaic.version = 11 : i64} {
  func.func @_se_kernel(%arg0: i32, %arg1: memref<1x8x256xf32, #tpu.memory_space<vmem>>, %arg2: memref<8x2xf32, #tpu.memory_space<vmem>>, %arg3: memref<2x8xf32, #tpu.memory_space<vmem>>, %arg4: memref<1x8x256xf32, #tpu.memory_space<vmem>>) attributes {dimension_semantics = [#tpu.dimension_semantics<parallel>], iteration_bounds = array<i64: 4>, scalar_prefetch = 0 : i64, scratch_operands = 0 : i64, tpu.core_type = #tpu.core_type<tc>, window_params = [{transform_indices = @transform_0, window_bounds = array<i64: 1, 8, 256>}, {pipeline_mode = #tpu.pipeline_mode<synchronous>, transform_indices = @transform_1, window_bounds = array<i64: 8, 2>}, {pipeline_mode = #tpu.pipeline_mode<synchronous>, transform_indices = @transform_2, window_bounds = array<i64: 2, 8>}, {transform_indices = @transform_3, window_bounds = array<i64: 1, 8, 256>}]} {
    %c0 = arith.constant 0 : index
    %c0_0 = arith.constant 0 : index
    %c0_1 = arith.constant 0 : index
    %0 = vector.load %arg1[%c0, %c0_0, %c0_1] : memref<1x8x256xf32, #tpu.memory_space<vmem>>, vector<1x8x256xf32>
    %cst = arith.constant dense<0.000000e+00> : vector<1x8xf32>
    %1 = vector.multi_reduction <add>, %0, %cst [2] : vector<1x8x256xf32> to vector<1x8xf32>
    %c0_2 = arith.constant 0 : index
    %c0_3 = arith.constant 0 : index
    %2 = vector.load %arg2[%c0_2, %c0_3] : memref<8x2xf32, #tpu.memory_space<vmem>>, vector<8x2xf32>
    %cst_4 = arith.constant dense<0.000000e+00> : vector<1x2xf32>
    %3 = tpu.matmul %1, %2, %cst_4 {dimension_numbers = #tpu.dot_dimension_numbers<[1], [0], [0], [1], [0, 0, 1, 1], [], []>} : vector<1x8xf32>, vector<8x2xf32>, vector<1x2xf32> -> vector<1x2xf32>
    %cst_5 = arith.constant 5.000000e-01 : f32
    %4 = vector.broadcast %cst_5 : f32 to vector<1x2xf32>
    %5 = arith.mulf %4, %3 : vector<1x2xf32>
    %cst_6 = arith.constant 0.707106769 : f32
    %6 = vector.broadcast %cst_6 : f32 to vector<1x2xf32>
    %7 = arith.mulf %3, %6 : vector<1x2xf32>
    %8 = math.erf %7 : vector<1x2xf32>
    %cst_7 = arith.constant 1.000000e+00 : f32
    %9 = vector.broadcast %cst_7 : f32 to vector<1x2xf32>
    %10 = arith.addf %9, %8 : vector<1x2xf32>
    %11 = arith.mulf %5, %10 : vector<1x2xf32>
    %c0_8 = arith.constant 0 : index
    %c0_9 = arith.constant 0 : index
    %12 = vector.load %arg3[%c0_8, %c0_9] : memref<2x8xf32, #tpu.memory_space<vmem>>, vector<2x8xf32>
    %cst_10 = arith.constant dense<0.000000e+00> : vector<1x8xf32>
    %13 = tpu.matmul %11, %12, %cst_10 {dimension_numbers = #tpu.dot_dimension_numbers<[1], [0], [0], [1], [0, 0, 1, 1], [], []>} : vector<1x2xf32>, vector<2x8xf32>, vector<1x8xf32> -> vector<1x8xf32>
    %14 = arith.negf %13 : vector<1x8xf32>
    %15 = math.exp %14 : vector<1x8xf32>
    %cst_11 = arith.constant 1.000000e+00 : f32
    %16 = vector.broadcast %cst_11 : f32 to vector<1x8xf32>
    %17 = arith.addf %16, %15 : vector<1x8xf32>
    %18 = arith.divf %16, %17 : vector<1x8xf32>
    %c0_12 = arith.constant 0 : index
    %c0_13 = arith.constant 0 : index
    %c0_14 = arith.constant 0 : index
    %19 = vector.load %arg1[%c0_12, %c0_13, %c0_14] : memref<1x8x256xf32, #tpu.memory_space<vmem>>, vector<1x8x256xf32>
    %20 = vector.shape_cast %18 : vector<1x8xf32> to vector<1x8x1xf32>
    %21 = vector.broadcast %20 : vector<1x8x1xf32> to vector<1x8x256xf32>
    %22 = arith.mulf %19, %21 : vector<1x8x256xf32>
    %c0_15 = arith.constant 0 : index
    %c0_16 = arith.constant 0 : index
    %c0_17 = arith.constant 0 : index
    %23 = vector.load %arg4[%c0_15, %c0_16, %c0_17] : memref<1x8x256xf32, #tpu.memory_space<vmem>>, vector<1x8x256xf32>
    tpu.vector_store %arg4[%c0_15, %c0_16, %c0_17], %22 {strides = array<i32>} : memref<1x8x256xf32, #tpu.memory_space<vmem>>, vector<1x8x256xf32>,
    return
  }
  func.func @transform_0(%arg0: i32) -> (i32, i32, i32) {
    %c0_i32 = arith.constant 0 : i32
    %c0_i32_0 = arith.constant 0 : i32
    %c0_i32_1 = arith.constant 0 : i32
    return %arg0, %c0_i32, %c0_i32_0 : i32, i32, i32
  }
  func.func @transform_1(%arg0: i32) -> (i32, i32) {
    %c0_i32 = arith.constant 0 : i32
    %c0_i32_0 = arith.constant 0 : i32
    %c0_i32_1 = arith.constant 0 : i32
    return %c0_i32, %c0_i32_0 : i32, i32
  }
  func.func @transform_2(%arg0: i32) -> (i32, i32) {
    %c0_i32 = arith.constant 0 : i32
    %c0_i32_0 = arith.constant 0 : i32
    %c0_i32_1 = arith.constant 0 : i32
    return %c0_i32, %c0_i32_0 : i32, i32
  }
  func.func @transform_3(%arg0: i32) -> (i32, i32, i32) {
    %c0_i32 = arith.constant 0 : i32
    %c0_i32_0 = arith.constant 0 : i32
    %c0_i32_1 = arith.constant 0 : i32
    return %arg0, %c0_i32, %c0_i32_0 : i32, i32, i32
  }
}

</mosaic_0001>

<llo_original>
// kernel: tpu_custom_call.1
$region0: #{tpu_custom_call.1}
  #allocation0 [shape = 'u32[]', space=smem, size = 0x4, offset = 0x4, fixed_abs, tag = 'smem constant byte address 0x4 - core index']
  #allocation1 [shape = 'u32[72,128]{1,0:T(1,128)}', space=vmem, size = 0x9000, scoped, tag = 'internal scratch']
  %s0 = inlined_call_operand.hbm [shape: f32[4,8,256], index: 0, kind: input, shape index: {}]
  %s1 = inlined_call_operand.vmem [shape: f32[8,2], index: 1, kind: input, shape index: {}]
  %s2 = inlined_call_operand.vmem [shape: f32[2,8], index: 2, kind: input, shape index: {}]
  %s3 = inlined_call_operand.hbm [shape: f32[4,8,256], index: 3, kind: output, shape index: {}]
  %s4 = sld [smem:[#allocation0]]
  $region49: #{tpu_custom_call.1} parent=0
    _
  %s6 = ssub.s32 1, %s4
  %s7 = scalar_select 0, %s6, %s4
  $region1: #{tpu_custom_call.1} parent=0
    #allocation2 [shape = 'u8[16384]{0}', space=vmem, size = 0x4000, scoped, tag = 'input window, operand 0']
    #allocation3 [shape = 's32[2]{0}', space=sflag, size = 0x8, scoped, tag = 'scoped memory for tpu_custom_call.1']
    #allocation4 [shape = 's32[2]{0}', space=sflag, size = 0x8, scoped, tag = 'scoped memory for tpu_custom_call.1']
    #allocation5 [shape = 'u8[16384]{0}', space=vmem, size = 0x4000, scoped, tag = 'output window, operand 0']
    %8 = vsyncpa [#allocation3], 0
    %s9 = scalar_lea.sflag [#allocation3], 1
    %10 = vsyncpa %s9, 0
    %11 = vsyncpa [#allocation4], 0
    %s12 = scalar_lea.sflag [#allocation4], 1
    %13 = vsyncpa %s12, 0
    loop: start=0, step=1, limit=6
    $region2: #{tpu_custom_call.1} parent=1 // loop_pre_header
      _
    $region3: #{tpu_custom_call.1} parent=1 // loop_header
      %s15 = sphi 0, %s19
      %p16 = scmp.ge.s32.totalorder %s15, 6
      %s25 = sphi 0, %s27
      %s28 = sphi 0, %s25
      %s29 = sphi 0, %s28
      %s45 = sphi 0, %s29
      %s49 = sphi 0, %s49
      %s51 = sphi 0, %s49
      %s52 = sphi 0, %s51
      %s66 = sphi 0, %s52
      %s70 = sphi 0, %s70
      %s72 = sphi 0, %s70
      %s73 = sphi 0, %s72
      %s87 = sphi 0, %s73
      %s93 = sphi 0, %s95
      %s96 = sphi 0, %s93
      %s97 = sphi 0, %s96
      %s113 = sphi 0, %s97
    $region4: #{tpu_custom_call.1} parent=1 // loop_header_branch
      %18 = sbr.rel (%p16) target = $region8
    $region5: #{tpu_custom_call.1} parent=1 // loop_body
      %s20 = ssub.s32 %s15, 1
      %s21 = ssub.s32 %s15, 2
      %s22 = sadd.s32 %s15, 1
      %s23 = ssub.s32 %s15, %s22
      %p24 = scmp.eq.s32.totalorder %s23, 0
      %s26 = sadd.s32 %s25, 1
      %s27 = scalar_select %p24, %s25, %s26
      %p30 = pneg %p24
      %p31 = scmp.eq.s32.totalorder %s15, 3
      %p32 = por %p30, %p31
      %p33 = scmp.ne.s32.totalorder %s25, %s28
      %p34 = scmp.eq.s32.totalorder %s15, 0
      %p35 = por %p33, %p34
      %p36 = scmp.ne.s32.totalorder %s25, %s28
      %p37 = scmp.eq.s32.totalorder %s20, 3
      %p38 = por %p36, %p37
      %p39 = scmp.ne.s32.totalorder %s28, %s29
      %p40 = scmp.eq.s32.totalorder %s20, 0
      %p41 = por %p39, %p40
      %p42 = scmp.ne.s32.totalorder %s28, %s29
      %p43 = scmp.eq.s32.totalorder %s21, 3
      %p44 = por %p42, %p43
      %p46 = scmp.ne.s32.totalorder %s29, %s45
      %p47 = scmp.eq.s32.totalorder %s21, 0
      %p48 = por %p46, %p47
      %s50 = sadd.s32 %s49, 1
      %p53 = scmp.eq.s32.totalorder %s15, 3
      %p54 = scmp.ne.s32.totalorder %s49, %s51
      %p55 = scmp.eq.s32.totalorder %s15, 0
      %p56 = por %p54, %p55
      %p57 = scmp.ne.s32.totalorder %s49, %s51
      %p58 = scmp.eq.s32.totalorder %s20, 3
      %p59 = por %p57, %p58
      %p60 = scmp.ne.s32.totalorder %s51, %s52
      %p61 = scmp.eq.s32.totalorder %s20, 0
      %p62 = por %p60, %p61
      %p63 = scmp.ne.s32.totalorder %s51, %s52
      %p64 = scmp.eq.s32.totalorder %s21, 3
      %p65 = por %p63, %p64
      %p67 = scmp.ne.s32.totalorder %s52, %s66
      %p68 = scmp.eq.s32.totalorder %s21, 0
      %p69 = por %p67, %p68
      %s71 = sadd.s32 %s70, 1
      %p74 = scmp.eq.s32.totalorder %s15, 3
      %p75 = scmp.ne.s32.totalorder %s70, %s72
      %p76 = scmp.eq.s32.totalorder %s15, 0
      %p77 = por %p75, %p76
      %p78 = scmp.ne.s32.totalorder %s70, %s72
      %p79 = scmp.eq.s32.totalorder %s20, 3
      %p80 = por %p78, %p79
      %p81 = scmp.ne.s32.totalorder %s72, %s73
      %p82 = scmp.eq.s32.totalorder %s20, 0
      %p83 = por %p81, %p82
      %p84 = scmp.ne.s32.totalorder %s72, %s73
      %p85 = scmp.eq.s32.totalorder %s21, 3
      %p86 = por %p84, %p85
      %p88 = scmp.ne.s32.totalorder %s73, %s87
      %p89 = scmp.eq.s32.totalorder %s21, 0
      %p90 = por %p88, %p89
      %s91 = ssub.s32 %s15, %s22
      %p92 = scmp.eq.s32.totalorder %s91, 0
      %s94 = sadd.s32 %s93, 1
      %s95 = scalar_select %p92, %s93, %s94
      %p98 = pneg %p92
      %p99 = scmp.eq.s32.totalorder %s15, 3
      %p100 = por %p98, %p99
      %p101 = scmp.ne.s32.totalorder %s93, %s96
      %p102 = scmp.eq.s32.totalorder %s15, 0
      %p103 = por %p101, %p102
      %p104 = scmp.ne.s32.totalorder %s93, %s96
      %p105 = scmp.eq.s32.totalorder %s20, 3
      %p106 = por %p104, %p105
      %p107 = scmp.ne.s32.totalorder %s96, %s97
      %p108 = scmp.eq.s32.totalorder %s20, 0
      %p109 = por %p107, %p108
      %p110 = scmp.ne.s32.totalorder %s96, %s97
      %p111 = scmp.eq.s32.totalorder %s21, 3
      %p112 = por %p110, %p111
      %p114 = scmp.ne.s32.totalorder %s97, %s113
      %p115 = scmp.eq.s32.totalorder %s21, 0
      %p116 = por %p114, %p115
      %p117 = scmp.le.s32.totalorder 1, %s15
      %p118 = scmp.lt.s32.totalorder %s15, 5
      %p119 = pnand %p117, %p118
      %p120 = pneg %p119
      // Predicated region
      $region9: #{tpu_custom_call.1} parent=5 // pred_check
        _
      $region10: #{tpu_custom_call.1} parent=5 // pred_check_branch
        %122 = sbr.rel (%p119) target = $region12
      $region11: #{tpu_custom_call.1} parent=5 // pred_region
        %s123 = ssub.s32 %s15, 1
        // Predicated region
        $region13: #{tpu_custom_call.1} parent=11 // pred_check
          %p124 = pneg %p62
        $region14: #{tpu_custom_call.1} parent=11 // pred_check_branch
          %126 = sbr.rel (%p124) target = $region16
        $region15: #{tpu_custom_call.1} parent=11 // pred_region
          _
        $region16: #{tpu_custom_call.1} parent=11 // pred_fallthru
          _
        // Predicated region
        $region17: #{tpu_custom_call.1} parent=11 // pred_check
          %p127 = pneg %p83
        $region18: #{tpu_custom_call.1} parent=11 // pred_check_branch
          %129 = sbr.rel (%p127) target = $region20
        $region19: #{tpu_custom_call.1} parent=11 // pred_region
          _
        $region20: #{tpu_custom_call.1} parent=11 // pred_fallthru
          _
      $region12: #{tpu_custom_call.1} parent=5 // pred_fallthru
        _
      %p130 = scmp.lt.s32.totalorder %s15, 4
      // Predicated region
      $region21: #{tpu_custom_call.1} parent=5 // pred_check
        %p131 = pneg %p130
      $region22: #{tpu_custom_call.1} parent=5 // pred_check_branch
        %133 = sbr.rel (%p131) target = $region24
      $region23: #{tpu_custom_call.1} parent=5 // pred_region
        // Predicated region
        $region25: #{tpu_custom_call.1} parent=23 // pred_check
          %p134 = pneg %p35
        $region26: #{tpu_custom_call.1} parent=23 // pred_check_branch
          %136 = sbr.rel (%p134) target = $region28
        $region27: #{tpu_custom_call.1} parent=23 // pred_region
          %s137 = sand.u32 %s25, 1
          %s138 = scalar_lea.sflag [#allocation3], %s137
          %s139 = sand.u32 %s25, 1
          %s140 = smul.addr %s139, 16
          %s141 = scalar_lea.vmem [#allocation2], %s140
          %143 = vsyncadd %s138, 0
          %s144 = smul.addr %s15, 2
          %s145 = smul.addr %s144, 8
          %s146 = scalar_lea.hbm %s0, %s145
          %s148 = sshll.u32 %s146, 4
          %s149 = int_to_ptr.hbm [resolvable:$true] %s148
          %s150 = sshll.u32 %s141, 4
          %s151 = int_to_ptr.vmem [resolvable:$true] %s150
          %153 = dma.hbm_to_vmem [thread:$0]  %s149, 256, %s151, %s138
        $region28: #{tpu_custom_call.1} parent=23 // pred_fallthru
          _
      $region24: #{tpu_custom_call.1} parent=5 // pred_fallthru
        _
      %p154 = scmp.le.s32.totalorder 1, %s15
      %p155 = scmp.lt.s32.totalorder %s15, 5
      %p156 = pnand %p154, %p155
      %p157 = pneg %p156
      // Predicated region
      $region29: #{tpu_custom_call.1} parent=5 // pred_check
        _
      $region30: #{tpu_custom_call.1} parent=5 // pred_check_branch
        %159 = sbr.rel (%p156) target = $region32
      $region31: #{tpu_custom_call.1} parent=5 // pred_region
        %s160 = ssub.s32 %s15, 1
        %s161 = sand.u32 %s28, 1
        %s162 = scalar_lea.sflag [#allocation3], %s161
        %s163 = sand.u32 %s28, 1
        %s164 = smul.addr %s163, 16
        %s165 = scalar_lea.vmem [#allocation2], %s164
        // Predicated region
        $region33: #{tpu_custom_call.1} parent=31 // pred_check
          %p166 = pneg %p41
        $region34: #{tpu_custom_call.1} parent=31 // pred_check_branch
          %168 = sbr.rel (%p166) target = $region36
        $region35: #{tpu_custom_call.1} parent=31 // pred_region
          %170 = dma.done %s162, 256
        $region36: #{tpu_custom_call.1} parent=31 // pred_fallthru
          _
        %s171 = sand.u32 %s28, 1
        %s172 = scalar_lea.sflag [#allocation3], %s171
        %s173 = sand.u32 %s28, 1
        %s174 = smul.addr %s173, 16
        %s175 = scalar_lea.vmem [#allocation2], %s174
        %p176 = pneg %p41
        %p177 = pneg %p38
        %p178 = pneg %p62
        %p179 = pneg %p59
        %p180 = pneg %p83
        %p181 = pneg %p80
        %p182 = pneg %p109
        %p183 = pneg %p106
        %s184 = sand.u32 %s96, 1
        %s185 = scalar_lea.sflag [#allocation4], %s184
        %s186 = sand.u32 %s96, 1
        %s187 = smul.addr %s186, 16
        %s188 = scalar_lea.vmem [#allocation5], %s187
        %v189 = vld [vmem:[%s165] sm:$0xff]
        %v190 = vld [vmem:[%s165 + $0x8] sm:$0xff]
        %v191 = vadd.f32 %v189, %v190
        %192 = vadd.xlane.f32.xlu0 %v191
        %v193 = vpop.xlane.xlu0 %192
        %v194 = vld [vmem:[%s1] sm:$0xff]
        %v196 = vlaneseq
        %v197 = vand.u32 %v196, 127
        %v198 = vperm.slane %v193, %v197
        %vm199 = vcmask 64512
        %v200 = vsel %vm199, %v198, 0
        %202 = vmatpush.msra.mxu0 0.0
        %203 = vmatpush.msra.mxu0 0.0
        %204 = vmatpush.msra.mxu0 0.0
        %205 = vmatpush.msra.mxu0 0.0
        %206 = vmatpush.msra.mxu0 0.0
        %207 = vmatpush.msra.mxu0 0.0
        %208 = vmatpush.msra.mxu0 0.0
        %209 = vmatpush.msra.mxu0 0.0
        %210 = vmatpush.msra.mxu0 0.0
        %211 = vmatpush.msra.mxu0 0.0
        %212 = vmatpush.msra.mxu0 0.0
        %213 = vmatpush.msra.mxu0 0.0
        %214 = vmatpush.msra.mxu0 0.0
        %215 = vmatpush.msra.mxu0 0.0
        %216 = vmatpush.msra.mxu0 0.0
        %217 = vmatpush.msra.mxu0 %v194
        %218 = vmatmul.f32.gmra.mxu0 %v200
        %v219 = vpop.f32.mrf.mxu0
        %v220 = vadd.f32 0.0, %v219
        %221 = vdwg.mxu0
        %v222 = vmul.f32 %v220, 0.5
        %v223 = vmul.f32 %v220, 0.70710677
        %v224 = vmul.f32 %v223, %v223
        %v225 = vmin.f32 16.0, %v224
        %v226 = vmul.f32 %v225, 2.1237322e-06
        %v227 = vadd.f32 %v226, 0.00028619796
        %v228 = vmul.f32 %v225, %v227
        %v229 = vadd.f32 %v228, 0.0036580483
        %v230 = vmul.f32 %v225, %v229
        %v231 = vadd.f32 %v230, 0.05243302
        %v232 = vmul.f32 %v225, %v231
        %v233 = vadd.f32 %v232, 0.18741608
        %v234 = vmul.f32 %v225, %v233
        %v235 = vadd.f32 %v234, 1.1283791
        %v236 = vmul.f32 %v223, %v235
        %v237 = vmul.f32 %v225, 3.8918573e-05
        %v238 = vadd.f32 %v237, 0.001143296
        %v239 = vmul.f32 %v225, %v238
        %v240 = vadd.f32 %v239, 0.014752088
        %v241 = vmul.f32 %v225, %v240
        %v242 = vadd.f32 %v241, 0.112945676
        %v243 = vmul.f32 %v225, %v242
        %v244 = vadd.f32 %v243, 0.4994258
        %v245 = vmul.f32 %v225, %v244
        %v246 = vadd.f32 %v245, 1.0
        %v247 = vrcp.pop %v246
        %v248 = vmul.f32 %v246, %v247
        %v249 = vsub.f32 1.0, %v248
        %v250 = vmul.f32 %v247, %v249
        %v251 = vadd.f32 %v247, %v250
        %vm252 = vweird.f32 %v246
        %vm253 = vweird.f32 %v247
        %vm254 = vmor %vm252, %vm253
        %v255 = vsel %vm254, %v247, %v251
        %v256 = vand.u32 2147483647, %v246
        %vm257 = vcmp.eq.f32.partialorder %v256, 8.507059e+37
        %v258 = vand.u32 %v246, 2147483648
        %v259 = vor.u32 1.1754944e-38, %v258
        %v260 = vsel %vm257, %v259, %v255
        %v261 = vmul.f32 %v236, %v260
        %v262 = vmin.f32 %v261, 1.0
        %v263 = vmax.f32 %v262, -1.0
        %v264 = vadd.f32 %v263, 1.0
        %v265 = vmul.f32 %v222, %v264
        %v266 = vld [vmem:[%s2] sm:$0x3]
        %vm267 = vcmask 15360
        %v269 = vsel %vm267, %v265, 0
        %vm271 = vcmask 1041408
        %v273 = vsel %vm271, %v266, 0
        %275 = vmatpush.msra.mxu0 0.0
        %276 = vmatpush.msra.mxu0 0.0
        %277 = vmatpush.msra.mxu0 0.0
        %278 = vmatpush.msra.mxu0 0.0
        %279 = vmatpush.msra.mxu0 0.0
        %280 = vmatpush.msra.mxu0 0.0
        %281 = vmatpush.msra.mxu0 0.0
        %282 = vmatpush.msra.mxu0 0.0
        %283 = vmatpush.msra.mxu0 0.0
        %284 = vmatpush.msra.mxu0 0.0
        %285 = vmatpush.msra.mxu0 0.0
        %286 = vmatpush.msra.mxu0 0.0
        %287 = vmatpush.msra.mxu0 0.0
        %288 = vmatpush.msra.mxu0 0.0
        %289 = vmatpush.msra.mxu0 0.0
        %290 = vmatpush.msra.mxu0 %v273
        %291 = vmatmul.f32.gmra.mxu0 %v269
        %v292 = vpop.f32.mrf.mxu0
        %v293 = vadd.f32 0.0, %v292
        %294 = vdwg.mxu0
        %v295 = vxor.u32 %v293, 2147483648
        %v296 = vmul.f32 %v295, 1.442695
        %v297 = vpow.pop %v296
        %v298 = vadd.f32 %v297, 1.0
        %v299 = vrcp.pop %v298
        %v300 = vmul.f32 %v298, %v299
        %v301 = vsub.f32 1.0, %v300
        %v302 = vmul.f32 %v299, %v301
        %v303 = vadd.f32 %v299, %v302
        %vm304 = vweird.f32 %v298
        %vm305 = vweird.f32 %v299
        %vm306 = vmor %vm304, %vm305
        %v307 = vsel %vm306, %v299, %v303
        %v308 = vand.u32 2147483647, %v298
        %vm309 = vcmp.eq.f32.partialorder %v308, 8.507059e+37
        %v310 = vand.u32 %v298, 2147483648
        %v311 = vor.u32 1.1754944e-38, %v310
        %v312 = vsel %vm309, %v311, %v307
        %v313 = vmul.f32 1.0, %v312
        %v314 = vperm.slane %v313, 0
        %v315 = vlaneseq
        %v316 = vshrl.u32 %v315, 7
        %318 = vset.pattern.permute.xlu0 %v316
        %319 = vperm.xlu0 %318, %v314
        %v320 = vpop.permute.xlu0 %319
        %v321 = vmul.f32 %v189, %v320
        %v322 = vmul.f32 %v190, %v320
        %323 = vst [vmem:[%s188] sm:$0xff] %v321
        %324 = vst [vmem:[%s188 + $0x8] sm:$0xff] %v322
        %s325 = sand.u32 %s96, 1
        %s326 = scalar_lea.sflag [#allocation4], %s325
        %s327 = sand.u32 %s96, 1
        %s328 = smul.addr %s327, 16
        %s329 = scalar_lea.vmem [#allocation5], %s328
        // Predicated region
        $region37: #{tpu_custom_call.1} parent=31 // pred_check
          %p330 = pneg %p106
        $region38: #{tpu_custom_call.1} parent=31 // pred_check_branch
          %332 = sbr.rel (%p330) target = $region40
        $region39: #{tpu_custom_call.1} parent=31 // pred_region
          %334 = vsyncadd %s326, 0
          %s335 = smul.addr %s20, 2
          %s336 = smul.addr %s335, 8
          %s337 = scalar_lea.hbm %s3, %s336
          %s339 = sshll.u32 %s329, 4
          %s340 = int_to_ptr.vmem [resolvable:$true] %s339
          %s341 = sshll.u32 %s337, 4
          %s342 = int_to_ptr.hbm [resolvable:$true] %s341
          %344 = dma.vmem_to_hbm [thread:$0]  %s340, 256, %s342, %s326
        $region40: #{tpu_custom_call.1} parent=31 // pred_fallthru
          _
      $region32: #{tpu_custom_call.1} parent=5 // pred_fallthru
        _
      %p345 = scmp.le.s32.totalorder 2, %s15
      // Predicated region
      $region41: #{tpu_custom_call.1} parent=5 // pred_check
        %p346 = pneg %p345
      $region42: #{tpu_custom_call.1} parent=5 // pred_check_branch
        %348 = sbr.rel (%p346) target = $region44
      $region43: #{tpu_custom_call.1} parent=5 // pred_region
        %s349 = ssub.s32 %s15, 2
        // Predicated region
        $region45: #{tpu_custom_call.1} parent=43 // pred_check
          %p350 = pneg %p112
        $region46: #{tpu_custom_call.1} parent=43 // pred_check_branch
          %352 = sbr.rel (%p350) target = $region48
        $region47: #{tpu_custom_call.1} parent=43 // pred_region
          %s353 = sand.u32 %s97, 1
          %s354 = scalar_lea.sflag [#allocation4], %s353
          %s355 = sand.u32 %s97, 1
          %s356 = smul.addr %s355, 16
          %s357 = scalar_lea.vmem [#allocation5], %s356
          %359 = dma.done %s354, 256
        $region48: #{tpu_custom_call.1} parent=43 // pred_fallthru
          _
      $region44: #{tpu_custom_call.1} parent=5 // pred_fallthru
        _
    $region6: #{tpu_custom_call.1} parent=1 // loop_footer
      %s19 = sadd.s32 1, %s15
    $region7: #{tpu_custom_call.1} parent=1 // loop_footer_branch
      %14 = sbr.rel target = $region3
    $region8: #{tpu_custom_call.1} parent=1 // loop_exit
      _
    %360 = vsyncpa [#allocation3], 1
    %s361 = scalar_lea.sflag [#allocation3], 1
    %362 = vsyncpa %s361, 1
    %363 = vsyncpa [#allocation4], 1
    %s364 = scalar_lea.sflag [#allocation4], 1
    %365 = vsyncpa %s364, 1

</llo_original>
